<compile_context>
chip_gen: v7x
topology: tpu7x:2x2x1
jax: 0.10.0
libtpu: 0.0.40
codegen_flags: <defaults>
</compile_context>

<pallas_src>
import numpy as np

import jax
import jax.numpy as jnp
from jax.experimental import pallas as pl
from jax.experimental.pallas import tpu as pltpu

NUM_GATES = 2  # nn.Linear(seq_len, 2) in the module


def _cdiv(a, b):
    return -(-a // b)


def _round_up(x, m):
    return _cdiv(x, m) * m


def _tpu_caps():
    """(max slabs per grid step, vmem_limit_bytes), derived per TPU generation."""
    kind = ""
    try:
        kind = jax.devices()[0].device_kind.lower()
    except Exception:
        pass
    if "v7" in kind:                       # 64 MiB physical VMEM, 2 TensorCores
        return 1024, 48 * 1024 * 1024
    return 2048, 64 * 1024 * 1024          # v5e / v6e: 128 MiB physical VMEM


def _expgate_kernel(req_ref, feat_ref, qf_ref, off_ref, tm_ref, r1_ref, r2_ref,
                    out_ref):
    """One grid step == a block of `bb` flattened (batch*agent) slabs.

    req_ref : (bb, Ra*Rd)          requests, per-slab flattened
    feat_ref: (bb, S*E)            features, per-slab flattened (lane-dense)
    qf_ref  : (S*E, G*(Rd+1))      folded Wg (x) [Wk^T Wq | Wk^T bq]
    off_ref : (1, G*(Rd+1))        folded bias offsets
    tm_ref  : (G*(Rd+1), G*Ra*Rd)  0/1 matrix: tile m_g across the Ra rows
    r1_ref  : (G*Ra*Rd, G*Ra)      0/1 matrix: segmented sum over Rd
    r2_ref  : (G*(Rd+1), G*Ra)     0/1 matrix: broadcast t_g over the Ra rows
    out_ref : (bb, G*Ra)           gate logits, lane = g*Ra + r
    """
    f32 = jnp.float32

    # Everything the gate needs from feat, in ONE folded 2-D MXU matmul:
    #   mt[b, g*(Rd+1)+d]  = m[b, g, d]      (d < Rd)
    #   mt[b, g*(Rd+1)+Rd] = t[b, g]
    mt = jnp.dot(feat_ref[...], qf_ref[...],
                 preferred_element_type=f32) + off_ref[...]

    # Tile m[b, g, :] across the Ra request rows (0/1 matmul -> no per-slab work).
    m_til = jnp.dot(mt, tm_ref[...], preferred_element_type=f32)  # (bb, G*Ra*Rd)

    req = req_ref[...].astype(f32)                                 # (bb, Ra*Rd)
    prod = jnp.concatenate([req, req], axis=-1) * m_til            # (bb, G*Ra*Rd)

    # logits[b, g*Ra+r] = sum_d req[b,r,d]*m[b,g,d] + t[b,g]
    out = (jnp.dot(prod, r1_ref[...], preferred_element_type=f32)
           + jnp.dot(mt, r2_ref[...], preferred_element_type=f32))
    out_ref[...] = out.astype(out_ref.dtype)


def _fold_params(params, s, e, ra, rd):
    """Fold Wg, Wk, Wq and all biases into tiny constant matrices (wrapper-side,
    O(S*E*Rd) work, f32 HIGHEST precision)."""
    hp = jax.lax.Precision.HIGHEST
    wk = params["wk"].astype(jnp.float32)   # (E, E)   k = feat @ wk.T + bk
    bk = params["bk"].astype(jnp.float32)   # (E,)
    wq = params["wq"].astype(jnp.float32)   # (E, Rd)  q = req  @ wq.T + bq
    bq = params["bq"].astype(jnp.float32)   # (E,)
    wg = params["wg"].astype(jnp.float32)   # (G, S)
    bg = params["bg"].astype(jnp.float32)   # (G,)
    g_dim = NUM_GATES

    c = jnp.sum(wg, axis=1)                                    # (G,)
    a = jnp.matmul(wk.T, wq, precision=hp)                     # (E, Rd)
    v = jnp.matmul(wk.T, bq[:, None], precision=hp)            # (E, 1)
    av = jnp.concatenate([a, v], axis=1)                       # (E, Rd+1)

    # qfull[s*E+e, g*(Rd+1)+cc] = wg[g, s] * av[e, cc]
    qfull = wg[:, :, None, None] * av[None, None, :, :]        # (G, S, E, Rd+1)
    qfull = qfull.transpose(1, 2, 0, 3).reshape(s * e, g_dim * (rd + 1))

    a0 = c[:, None] * jnp.matmul(bk[None, :], wq, precision=hp)    # (G, Rd)
    t0 = c * jnp.sum(bq * bk) + bg                                 # (G,)
    off = jnp.concatenate([a0, t0[:, None]], axis=1).reshape(1, g_dim * (rd + 1))

    ncol = g_dim * (rd + 1)
    tm = np.zeros((ncol, g_dim * ra * rd), np.float32)
    r1 = np.zeros((g_dim * ra * rd, g_dim * ra), np.float32)
    r2 = np.zeros((ncol, g_dim * ra), np.float32)
    for g in range(g_dim):
        for r in range(ra):
            r2[g * (rd + 1) + rd, g * ra + r] = 1.0
            for d in range(rd):
                tm[g * (rd + 1) + d, g * ra * rd + r * rd + d] = 1.0
                r1[g * ra * rd + r * rd + d, g * ra + r] = 1.0
    return qfull, off, jnp.asarray(tm), jnp.asarray(r1), jnp.asarray(r2)


def exp_gate_forward(requests, feat, params, test_mode=False, all_through=False):
    """Pallas implementation of ExpGate.forward.  Returns (probs, masks)."""
    bs, na, ra, rd = requests.shape
    _, _, s, e = feat.shape
    g_dim = NUM_GATES

    if all_through:
        # probs = None, masks = th.ones_like(requests[:, :, :, [0]]) (float ones)
        return None, jnp.ones_like(requests[:, :, :, :1])

    b = bs * na
    # Free (contiguous) reshapes: the big activations are streamed in their
    # incoming dtype, with NO wrapper-side pad/cast copy.
    req_flat = requests.reshape(b, ra * rd)
    feat_flat = feat.reshape(b, s * e)

    qfull, off, tm, r1, r2 = _fold_params(params, s, e, ra, rd)
    qfull = qfull.astype(feat_flat.dtype)      # MXU partner of feat (bf16 or f32)
    ncol = g_dim * (rd + 1)

    cap, vmem_limit = _tpu_caps()
    if b <= 8:
        b_blk = b                              # single block == full array dim
    else:
        # >= 2 grid steps whenever possible so both v7x TensorCores get work;
        # block stays a multiple of 8 sublanes and within the per-gen VMEM cap.
        b_blk = max(8, min(cap, _round_up(_cdiv(b, 2), 8)))
    nsteps = _cdiv(b, b_blk)

    logits_flat = pl.pallas_call(
        _expgate_kernel,
        grid=(nsteps,),
        out_shape=jax.ShapeDtypeStruct((b, g_dim * ra), jnp.float32),
        in_specs=[
            pl.BlockSpec((b_blk, ra * rd), lambda i: (i, 0)),        # requests
            pl.BlockSpec((b_blk, s * e), lambda i: (i, 0)),          # feat
            pl.BlockSpec((s * e, ncol), lambda i: (0, 0)),           # folded weights
            pl.BlockSpec((1, ncol), lambda i: (0, 0)),               # folded biases
            pl.BlockSpec((ncol, g_dim * ra * rd), lambda i: (0, 0)), # m-tiling 0/1
            pl.BlockSpec((g_dim * ra * rd, g_dim * ra), lambda i: (0, 0)),  # reduce 0/1
            pl.BlockSpec((ncol, g_dim * ra), lambda i: (0, 0)),      # t-broadcast 0/1
        ],
        out_specs=pl.BlockSpec((b_blk, g_dim * ra), lambda i: (i, 0)),
        compiler_params=pltpu.CompilerParams(
            dimension_semantics=("parallel",),
            vmem_limit_bytes=vmem_limit),
    )(req_flat, feat_flat, qfull, off, tm, r1, r2)

    # lane = g*Ra + r  ->  (bs, na, Ra, 2)   (tiny XLA epilogue, O(b*Ra))
    logits = logits_flat.reshape(bs, na, g_dim, ra).transpose(0, 1, 3, 2)
    l0, l1 = logits[..., :1], logits[..., 1:]
    masks = l0 > l1                          # == softmax(logits)[..., 0] > 0.5
    if test_mode:
        probs = jax.nn.sigmoid(l0 - l1)      # == softmax(logits)[..., :1]
    else:
        probs = logits                       # raw gate output (train path)
    return probs, masks


def _reference(requests, feat, params, test_mode):
    """Pure-JAX reference mirroring the PyTorch forward (HIGHEST precision)."""
    hp = jax.lax.Precision.HIGHEST
    req = requests.astype(jnp.float32)
    ft = feat.astype(jnp.float32)
    k = jnp.einsum("bnse,oe->bnso", ft, params["wk"], precision=hp) + params["bk"]
    q = jnp.einsum("bnrd,od->bnro", req, params["wq"], precision=hp) + params["bq"]
    w = jnp.einsum("bnro,bnso->bnrs", q, k, precision=hp)
    logits = jnp.einsum("bnrs,gs->bnrg", w, params["wg"], precision=hp) + params["bg"]
    p0 = jax.nn.softmax(logits, axis=-1)[..., :1]
    masks = p0 > 0.5
    probs = p0 if test_mode else logits
    return probs, masks, p0


if __name__ == "__main__":
    bs, n_agents = 2, 4          # reply_agents == n_agents
    request_agents = 4
    request_dim = 8
    encode_dim = 32
    num_seg = 8                  # == seq_len = sum(seg_num for obs_segs)

    key = jax.random.PRNGKey(0)
    keys = jax.random.split(key, 8)
    params = {
        "wk": jax.random.normal(keys[0], (encode_dim, encode_dim), jnp.float32) * 0.1,
        "bk": jax.random.normal(keys[1], (encode_dim,), jnp.float32) * 0.1,
        "wq": jax.random.normal(keys[2], (encode_dim, request_dim), jnp.float32) * 0.1,
        "bq": jax.random.normal(keys[3], (encode_dim,), jnp.float32) * 0.1,
        "wg": jax.random.normal(keys[4], (2, num_seg), jnp.float32) * 0.1,
        "bg": jax.random.normal(keys[5], (2,), jnp.float32) * 0.1,
    }
    requests = jax.random.normal(
        keys[6], (bs, n_agents, request_agents, request_dim), jnp.float32)
    feat = jax.random.normal(
        keys[7], (bs, n_agents, num_seg, encode_dim), jnp.float32)

    def _check(reqs, fts, tol, margin):
        good = True
        for test_mode in (False, True):
            probs, masks = exp_gate_forward(reqs, fts, params, test_mode=test_mode)
            jax.block_until_ready(probs)
            jax.block_until_ready(masks)
            ref_probs, ref_masks, ref_p0 = _reference(reqs, fts, params, test_mode)
            if probs.shape != ref_probs.shape:
                good = False
                continue
            if not bool(jnp.allclose(probs.astype(jnp.float32), ref_probs,
                                     atol=tol, rtol=tol)):
                good = False
            # Only compare the boolean gate away from the 0.5 decision boundary
            # so tiny numeric differences cannot flip a bit.
            away = jnp.abs(ref_p0 - 0.5) > margin
            if not bool(jnp.all(jnp.where(away, masks == ref_masks, True))):
                good = False
        return good

    ok = True
    # f32 streaming path
    ok &= _check(requests, feat, tol=1e-2, margin=1e-2)
    # bf16 streaming path (half the HBM traffic; accumulation stays f32)
    ok &= _check(requests.astype(jnp.bfloat16), feat.astype(jnp.bfloat16),
                 tol=3e-2, margin=3e-2)

    # all_through path (plain JAX glue, no kernel needed)
    probs_at, masks_at = exp_gate_forward(requests, feat, params, all_through=True)
    jax.block_until_ready(masks_at)
    if probs_at is not None or masks_at.shape != (bs, n_agents,
                                                  request_agents, 1):
        ok = False

    print("KERNEL_OK" if ok else "KERNEL_MISMATCH")
</pallas_src>

<mosaic_0001>
module attributes {stable_mosaic.version = 11 : i64} {
  func.func @_expgate_kernel(%arg0: i32, %arg1: memref<8x32xf32, #tpu.memory_space<vmem>>, %arg2: memref<8x256xf32, #tpu.memory_space<vmem>>, %arg3: memref<256x18xf32, #tpu.memory_space<vmem>>, %arg4: memref<1x18xf32, #tpu.memory_space<vmem>>, %arg5: memref<18x64xf32, #tpu.memory_space<vmem>>, %arg6: memref<64x8xf32, #tpu.memory_space<vmem>>, %arg7: memref<18x8xf32, #tpu.memory_space<vmem>>, %arg8: memref<8x8xf32, #tpu.memory_space<vmem>>) attributes {dimension_semantics = [#tpu.dimension_semantics<parallel>], iteration_bounds = array<i64: 1>, scalar_prefetch = 0 : i64, scratch_operands = 0 : i64, tpu.core_type = #tpu.core_type<tc>, window_params = [{transform_indices = @transform_0, window_bounds = array<i64: 8, 32>}, {transform_indices = @transform_1, window_bounds = array<i64: 8, 256>}, {pipeline_mode = #tpu.pipeline_mode<synchronous>, transform_indices = @transform_2, window_bounds = array<i64: 256, 18>}, {pipeline_mode = #tpu.pipeline_mode<synchronous>, transform_indices = @transform_3, window_bounds = array<i64: 1, 18>}, {pipeline_mode = #tpu.pipeline_mode<synchronous>, transform_indices = @transform_4, window_bounds = array<i64: 18, 64>}, {pipeline_mode = #tpu.pipeline_mode<synchronous>, transform_indices = @transform_5, window_bounds = array<i64: 64, 8>}, {pipeline_mode = #tpu.pipeline_mode<synchronous>, transform_indices = @transform_6, window_bounds = array<i64: 18, 8>}, {transform_indices = @transform_7, window_bounds = array<i64: 8, 8>}]} {
    %c0 = arith.constant 0 : index
    %c0_0 = arith.constant 0 : index
    %0 = vector.load %arg2[%c0, %c0_0] : memref<8x256xf32, #tpu.memory_space<vmem>>, vector<8x256xf32>
    %c0_1 = arith.constant 0 : index
    %c0_2 = arith.constant 0 : index
    %1 = vector.load %arg3[%c0_1, %c0_2] : memref<256x18xf32, #tpu.memory_space<vmem>>, vector<256x18xf32>
    %cst = arith.constant dense<0.000000e+00> : vector<8x18xf32>
    %2 = tpu.matmul %0, %1, %cst {dimension_numbers = #tpu.dot_dimension_numbers<[1], [0], [0], [1], [0, 0, 1, 1], [], []>} : vector<8x256xf32>, vector<256x18xf32>, vector<8x18xf32> -> vector<8x18xf32>
    %c0_3 = arith.constant 0 : index
    %c0_4 = arith.constant 0 : index
    %3 = vector.load %arg4[%c0_3, %c0_4] : memref<1x18xf32, #tpu.memory_space<vmem>>, vector<1x18xf32>
    %4 = vector.broadcast %3 : vector<1x18xf32> to vector<8x18xf32>
    %5 = arith.addf %2, %4 : vector<8x18xf32>
    %c0_5 = arith.constant 0 : index
    %c0_6 = arith.constant 0 : index
    %6 = vector.load %arg5[%c0_5, %c0_6] : memref<18x64xf32, #tpu.memory_space<vmem>>, vector<18x64xf32>
    %cst_7 = arith.constant dense<0.000000e+00> : vector<8x64xf32>
    %7 = tpu.matmul %5, %6, %cst_7 {dimension_numbers = #tpu.dot_dimension_numbers<[1], [0], [0], [1], [0, 0, 1, 1], [], []>} : vector<8x18xf32>, vector<18x64xf32>, vector<8x64xf32> -> vector<8x64xf32>
    %c0_8 = arith.constant 0 : index
    %c0_9 = arith.constant 0 : index
    %8 = vector.load %arg1[%c0_8, %c0_9] : memref<8x32xf32, #tpu.memory_space<vmem>>, vector<8x32xf32>
    %9 = tpu.concatenate %8, %8 in 1 : vector<8x32xf32>, vector<8x32xf32> -> vector<8x64xf32>
    %10 = arith.mulf %9, %7 : vector<8x64xf32>
    %c0_10 = arith.constant 0 : index
    %c0_11 = arith.constant 0 : index
    %11 = vector.load %arg6[%c0_10, %c0_11] : memref<64x8xf32, #tpu.memory_space<vmem>>, vector<64x8xf32>
    %cst_12 = arith.constant dense<0.000000e+00> : vector<8x8xf32>
    %12 = tpu.matmul %10, %11, %cst_12 {dimension_numbers = #tpu.dot_dimension_numbers<[1], [0], [0], [1], [0, 0, 1, 1], [], []>} : vector<8x64xf32>, vector<64x8xf32>, vector<8x8xf32> -> vector<8x8xf32>
    %c0_13 = arith.constant 0 : index
    %c0_14 = arith.constant 0 : index
    %13 = vector.load %arg7[%c0_13, %c0_14] : memref<18x8xf32, #tpu.memory_space<vmem>>, vector<18x8xf32>
    %cst_15 = arith.constant dense<0.000000e+00> : vector<8x8xf32>
    %14 = tpu.matmul %5, %13, %cst_15 {dimension_numbers = #tpu.dot_dimension_numbers<[1], [0], [0], [1], [0, 0, 1, 1], [], []>} : vector<8x18xf32>, vector<18x8xf32>, vector<8x8xf32> -> vector<8x8xf32>
    %15 = arith.addf %12, %14 : vector<8x8xf32>
    %c0_16 = arith.constant 0 : index
    %c0_17 = arith.constant 0 : index
    %16 = vector.load %arg8[%c0_16, %c0_17] : memref<8x8xf32, #tpu.memory_space<vmem>>, vector<8x8xf32>
    tpu.vector_store %arg8[%c0_16, %c0_17], %15 {strides = array<i32>} : memref<8x8xf32, #tpu.memory_space<vmem>>, vector<8x8xf32>,
    return
  }
  func.func @transform_0(%arg0: i32) -> (i32, i32) {
    %c0_i32 = arith.constant 0 : i32
    %c0_i32_0 = arith.constant 0 : i32
    return %arg0, %c0_i32 : i32, i32
  }
  func.func @transform_1(%arg0: i32) -> (i32, i32) {
    %c0_i32 = arith.constant 0 : i32
    %c0_i32_0 = arith.constant 0 : i32
    return %arg0, %c0_i32 : i32, i32
  }
  func.func @transform_2(%arg0: i32) -> (i32, i32) {
    %c0_i32 = arith.constant 0 : i32
    %c0_i32_0 = arith.constant 0 : i32
    %c0_i32_1 = arith.constant 0 : i32
    return %c0_i32, %c0_i32_0 : i32, i32
  }
  func.func @transform_3(%arg0: i32) -> (i32, i32) {
    %c0_i32 = arith.constant 0 : i32
    %c0_i32_0 = arith.constant 0 : i32
    %c0_i32_1 = arith.constant 0 : i32
    return %c0_i32, %c0_i32_0 : i32, i32
  }
  func.func @transform_4(%arg0: i32) -> (i32, i32) {
    %c0_i32 = arith.constant 0 : i32
    %c0_i32_0 = arith.constant 0 : i32
    %c0_i32_1 = arith.constant 0 : i32
    return %c0_i32, %c0_i32_0 : i32, i32
  }
  func.func @transform_5(%arg0: i32) -> (i32, i32) {
    %c0_i32 = arith.constant 0 : i32
    %c0_i32_0 = arith.constant 0 : i32
    %c0_i32_1 = arith.constant 0 : i32
    return %c0_i32, %c0_i32_0 : i32, i32
  }
  func.func @transform_6(%arg0: i32) -> (i32, i32) {
    %c0_i32 = arith.constant 0 : i32
    %c0_i32_0 = arith.constant 0 : i32
    %c0_i32_1 = arith.constant 0 : i32
    return %c0_i32, %c0_i32_0 : i32, i32
  }
  func.func @transform_7(%arg0: i32) -> (i32, i32) {
    %c0_i32 = arith.constant 0 : i32
    %c0_i32_0 = arith.constant 0 : i32
    return %arg0, %c0_i32 : i32, i32
  }
}

</mosaic_0001>

<llo_original>
// kernel: tpu_custom_call.1
$region0: #{tpu_custom_call.1}
  #allocation0 [shape = 'u32[]', space=smem, size = 0x4, offset = 0x4, fixed_abs, tag = 'smem constant byte address 0x4 - core index']
  #allocation1 [shape = 'u32[144,128]{1,0:T(1,128)}', space=vmem, size = 0x12000, scoped, tag = 'internal scratch']
  %s0 = inlined_call_operand.hbm [shape: f32[8,32], index: 0, kind: input, shape index: {}]
  %s1 = inlined_call_operand.hbm [shape: f32[8,256], index: 1, kind: input, shape index: {}]
  %s2 = inlined_call_operand.hbm [shape: f32[256,18], index: 2, kind: input, shape index: {}]
  %s3 = inlined_call_operand.hbm [shape: f32[1,18], index: 3, kind: input, shape index: {}]
  %s4 = inlined_call_operand.hbm [shape: f32[18,64], index: 4, kind: input, shape index: {}]
  %s5 = inlined_call_operand.hbm [shape: f32[64,8], index: 5, kind: input, shape index: {}]
  %s6 = inlined_call_operand.hbm [shape: f32[18,8], index: 6, kind: input, shape index: {}]
  %s7 = inlined_call_operand.hbm [shape: f32[8,8], index: 7, kind: output, shape index: {}]
  %s8 = sld [smem:[#allocation0]]
  $region66: #{tpu_custom_call.1} parent=0
    _
  %s10 = ssub.s32 1, %s8
  %s11 = scalar_select 0, %s10, %s8
  $region1: #{tpu_custom_call.1} parent=0
    #allocation2 [shape = 'u8[4096]{0}', space=vmem, size = 0x1000, scoped, tag = 'input window, operand 0, single buffered']
    #allocation3 [shape = 's32[1]{0}', space=sflag, size = 0x4, scoped, tag = 'scoped memory for tpu_custom_call.1']
    #allocation4 [shape = 's32[1]{0}', space=sflag, size = 0x4, scoped, tag = 'scoped memory for tpu_custom_call.1']
    #allocation5 [shape = 'u8[8192]{0}', space=vmem, size = 0x2000, scoped, tag = 'input window, operand 1, single buffered']
    #allocation6 [shape = 's32[1]{0}', space=sflag, size = 0x4, scoped, tag = 'scoped memory for tpu_custom_call.1']
    #allocation7 [shape = 'u8[131072]{0}', space=vmem, size = 0x20000, scoped, tag = 'input window, operand 2, single buffered']
    #allocation8 [shape = 'u8[512]{0}', space=vmem, size = 0x400, scoped, tag = 'input window, operand 3, single buffered']
    #allocation9 [shape = 's32[1]{0}', space=sflag, size = 0x4, scoped, tag = 'scoped memory for tpu_custom_call.1']
    #allocation10 [shape = 'u8[12288]{0}', space=vmem, size = 0x3000, scoped, tag = 'input window, operand 4, single buffered']
    #allocation11 [shape = 'u8[32768]{0}', space=vmem, size = 0x8000, scoped, tag = 'input window, operand 5, single buffered']
    #allocation12 [shape = 's32[1]{0}', space=sflag, size = 0x4, scoped, tag = 'scoped memory for tpu_custom_call.1']
    #allocation13 [shape = 'u8[12288]{0}', space=vmem, size = 0x3000, scoped, tag = 'input window, operand 6, single buffered']
    #allocation14 [shape = 'u8[4096]{0}', space=vmem, size = 0x1000, scoped, tag = 'output window, operand 0, single buffered']
    %12 = vsyncpa [#allocation3], 0
    %13 = vsyncpa [#allocation6], 0
    %14 = vsyncpa [#allocation9], 0
    %15 = vsyncpa [#allocation12], 0
    %16 = vsyncpa [#allocation4], 0
    // Predicated region
    $region2: #{tpu_custom_call.1} parent=1 // pred_check
      _
    $region3: #{tpu_custom_call.1} parent=1 // pred_check_branch
      %18 = sbr.rel (0) target = $region5
    $region4: #{tpu_custom_call.1} parent=1 // pred_region
      %s20 = ssub.s32 128, 128
      %21 = vsyncadd [#allocation3], %s20
      %s23 = sshll.u32 [#allocation2], 4
      %s24 = int_to_ptr.vmem [resolvable:$true] %s23
      %26 = dma.hbm_to_vmem [thread:$0]  %s0, 128, %s24, [#allocation3]
    $region5: #{tpu_custom_call.1} parent=1 // pred_fallthru
      _
    // Predicated region
    $region6: #{tpu_custom_call.1} parent=1 // pred_check
      _
    $region7: #{tpu_custom_call.1} parent=1 // pred_check_branch
      %28 = sbr.rel (0) target = $region9
    $region8: #{tpu_custom_call.1} parent=1 // pred_region
      %s30 = ssub.s32 256, 256
      %31 = vsyncadd [#allocation6], %s30
      %s33 = sshll.u32 [#allocation5], 4
      %s34 = int_to_ptr.vmem [resolvable:$true] %s33
      %36 = dma.hbm_to_vmem [thread:$0]  %s1, 256, %s34, [#allocation6]
    $region9: #{tpu_custom_call.1} parent=1 // pred_fallthru
      _
    // Predicated region
    $region10: #{tpu_custom_call.1} parent=1 // pred_check
      _
    $region11: #{tpu_custom_call.1} parent=1 // pred_check_branch
      %38 = sbr.rel (0) target = $region13
    $region12: #{tpu_custom_call.1} parent=1 // pred_region
      %s40 = ssub.s32 4096, 4096
      %41 = vsyncadd [#allocation6], %s40
      %s42 = sshll.u32 [#allocation7], 4
      %s43 = int_to_ptr.vmem [resolvable:$true] %s42
      %48 = dma.hbm_to_vmem [thread:$0]  %s2, 4096, %s43, [#allocation6], 128, 128, 8
    $region13: #{tpu_custom_call.1} parent=1 // pred_fallthru
      _
    // Predicated region
    $region14: #{tpu_custom_call.1} parent=1 // pred_check
      _
    $region15: #{tpu_custom_call.1} parent=1 // pred_check_branch
      %50 = sbr.rel (0) target = $region17
    $region16: #{tpu_custom_call.1} parent=1 // pred_region
      %s52 = ssub.s32 16, 16
      %53 = vsyncadd [#allocation9], %s52
      %s55 = sshll.u32 [#allocation8], 4
      %s56 = int_to_ptr.vmem [resolvable:$true] %s55
      %58 = dma.hbm_to_vmem [thread:$0]  %s3, 16, %s56, [#allocation9]
    $region17: #{tpu_custom_call.1} parent=1 // pred_fallthru
      _
    // Predicated region
    $region18: #{tpu_custom_call.1} parent=1 // pred_check
      _
    $region19: #{tpu_custom_call.1} parent=1 // pred_check_branch
      %60 = sbr.rel (0) target = $region21
    $region20: #{tpu_custom_call.1} parent=1 // pred_region
      %s62 = ssub.s32 384, 384
      %63 = vsyncadd [#allocation9], %s62
      %s64 = sshll.u32 [#allocation10], 4
      %s65 = int_to_ptr.vmem [resolvable:$true] %s64
      %70 = dma.hbm_to_vmem [thread:$0]  %s4, 384, %s65, [#allocation9], 128, 128, 8
    $region21: #{tpu_custom_call.1} parent=1 // pred_fallthru
      _
    // Predicated region
    $region22: #{tpu_custom_call.1} parent=1 // pred_check
      _
    $region23: #{tpu_custom_call.1} parent=1 // pred_check_branch
      %72 = sbr.rel (0) target = $region25
    $region24: #{tpu_custom_call.1} parent=1 // pred_region
      %s74 = ssub.s32 1024, 1024
      %75 = vsyncadd [#allocation12], %s74
      %s76 = sshll.u32 [#allocation11], 4
      %s77 = int_to_ptr.vmem [resolvable:$true] %s76
      %82 = dma.hbm_to_vmem [thread:$0]  %s5, 1024, %s77, [#allocation12], 128, 128, 8
    $region25: #{tpu_custom_call.1} parent=1 // pred_fallthru
      _
    // Predicated region
    $region26: #{tpu_custom_call.1} parent=1 // pred_check
      _
    $region27: #{tpu_custom_call.1} parent=1 // pred_check_branch
      %84 = sbr.rel (0) target = $region29
    $region28: #{tpu_custom_call.1} parent=1 // pred_region
      %s86 = ssub.s32 384, 384
      %87 = vsyncadd [#allocation12], %s86
      %s88 = sshll.u32 [#allocation13], 4
      %s89 = int_to_ptr.vmem [resolvable:$true] %s88
      %94 = dma.hbm_to_vmem [thread:$0]  %s6, 384, %s89, [#allocation12], 128, 128, 8
    $region29: #{tpu_custom_call.1} parent=1 // pred_fallthru
      _
    // Predicated region
    $region30: #{tpu_custom_call.1} parent=1 // pred_check
      _
    $region31: #{tpu_custom_call.1} parent=1 // pred_check_branch
      %96 = sbr.rel (0) target = $region33
    $region32: #{tpu_custom_call.1} parent=1 // pred_region
      %97 = dma.done [#allocation3], 128
    $region33: #{tpu_custom_call.1} parent=1 // pred_fallthru
      _
    // Predicated region
    $region34: #{tpu_custom_call.1} parent=1 // pred_check
      _
    $region35: #{tpu_custom_call.1} parent=1 // pred_check_branch
      %99 = sbr.rel (0) target = $region37
    $region36: #{tpu_custom_call.1} parent=1 // pred_region
      %100 = dma.done [#allocation6], 256
    $region37: #{tpu_custom_call.1} parent=1 // pred_fallthru
      _
    // Predicated region
    $region38: #{tpu_custom_call.1} parent=1 // pred_check
      _
    $region39: #{tpu_custom_call.1} parent=1 // pred_check_branch
      %102 = sbr.rel (0) target = $region41
    $region40: #{tpu_custom_call.1} parent=1 // pred_region
      %103 = dma.done [#allocation6], 4096
    $region41: #{tpu_custom_call.1} parent=1 // pred_fallthru
      _
    // Predicated region
    $region42: #{tpu_custom_call.1} parent=1 // pred_check
      _
    $region43: #{tpu_custom_call.1} parent=1 // pred_check_branch
      %105 = sbr.rel (0) target = $region45
    $region44: #{tpu_custom_call.1} parent=1 // pred_region
      %106 = dma.done [#allocation9], 16
    $region45: #{tpu_custom_call.1} parent=1 // pred_fallthru
      _
    // Predicated region
    $region46: #{tpu_custom_call.1} parent=1 // pred_check
      _
    $region47: #{tpu_custom_call.1} parent=1 // pred_check_branch
      %108 = sbr.rel (0) target = $region49
    $region48: #{tpu_custom_call.1} parent=1 // pred_region
      %109 = dma.done [#allocation9], 384
    $region49: #{tpu_custom_call.1} parent=1 // pred_fallthru
      _
    // Predicated region
    $region50: #{tpu_custom_call.1} parent=1 // pred_check
      _
    $region51: #{tpu_custom_call.1} parent=1 // pred_check_branch
      %111 = sbr.rel (0) target = $region53
    $region52: #{tpu_custom_call.1} parent=1 // pred_region
      %112 = dma.done [#allocation12], 1024
    $region53: #{tpu_custom_call.1} parent=1 // pred_fallthru
      _
    // Predicated region
    $region54: #{tpu_custom_call.1} parent=1 // pred_check
      _
    $region55: #{tpu_custom_call.1} parent=1 // pred_check_branch
      %114 = sbr.rel (0) target = $region57
    $region56: #{tpu_custom_call.1} parent=1 // pred_region
      %115 = dma.done [#allocation12], 384
    $region57: #{tpu_custom_call.1} parent=1 // pred_fallthru
      _
    %v116 = vld [vmem:[#allocation5] sm:$0xff]
    %v117 = vld [vmem:[#allocation5 + $0x8] sm:$0xff]
    %v118 = vld [vmem:[#allocation7] sm:$0xff]
    %v119 = vld [vmem:[#allocation7 + $0x8] sm:$0xff]
    %v120 = vld [vmem:[#allocation7 + $0x10] sm:$0xff]
    %v121 = vld [vmem:[#allocation7 + $0x18] sm:$0xff]
    %v122 = vld [vmem:[#allocation7 + $0x20] sm:$0xff]
    %v123 = vld [vmem:[#allocation7 + $0x28] sm:$0xff]
    %v124 = vld [vmem:[#allocation7 + $0x30] sm:$0xff]
    %v125 = vld [vmem:[#allocation7 + $0x38] sm:$0xff]
    %v126 = vld [vmem:[#allocation7 + $0x40] sm:$0xff]
    %v127 = vld [vmem:[#allocation7 + $0x48] sm:$0xff]
    %v128 = vld [vmem:[#allocation7 + $0x50] sm:$0xff]
    %v129 = vld [vmem:[#allocation7 + $0x58] sm:$0xff]
    %v130 = vld [vmem:[#allocation7 + $0x60] sm:$0xff]
    %v131 = vld [vmem:[#allocation7 + $0x68] sm:$0xff]
    %v132 = vld [vmem:[#allocation7 + $0x70] sm:$0xff]
    %v133 = vld [vmem:[#allocation7 + $0x78] sm:$0xff]
    %v134 = vld [vmem:[#allocation7 + $0x80] sm:$0xff]
    %v135 = vld [vmem:[#allocation7 + $0x88] sm:$0xff]
    %v136 = vld [vmem:[#allocation7 + $0x90] sm:$0xff]
    %v137 = vld [vmem:[#allocation7 + $0x98] sm:$0xff]
    %v138 = vld [vmem:[#allocation7 + $0xa0] sm:$0xff]
    %v139 = vld [vmem:[#allocation7 + $0xa8] sm:$0xff]
    %v140 = vld [vmem:[#allocation7 + $0xb0] sm:$0xff]
    %v141 = vld [vmem:[#allocation7 + $0xb8] sm:$0xff]
    %v142 = vld [vmem:[#allocation7 + $0xc0] sm:$0xff]
    %v143 = vld [vmem:[#allocation7 + $0xc8] sm:$0xff]
    %v144 = vld [vmem:[#allocation7 + $0xd0] sm:$0xff]
    %v145 = vld [vmem:[#allocation7 + $0xd8] sm:$0xff]
    %v146 = vld [vmem:[#allocation7 + $0xe0] sm:$0xff]
    %v147 = vld [vmem:[#allocation7 + $0xe8] sm:$0xff]
    %v148 = vld [vmem:[#allocation7 + $0xf0] sm:$0xff]
    %v149 = vld [vmem:[#allocation7 + $0xf8] sm:$0xff]
    %v150 = vld [vmem:[#allocation8] sm:$0x1]
    %v152 = vlaneseq
    %v153 = vshrl.u32 %v152, 7
    %v154 = vsub.s32 0, %v153
    %v155 = vrot.slane %v150, %v154
    %157 = vmatprep.subr.mxu0 0.0
    %158 = vmatpush1.msra.mxu0 %v118
    %159 = vmatprep.subr.mxu0 0.0
    %160 = vmatpush1.msra.mxu0 %v119
    %161 = vmatprep.subr.mxu0 0.0
    %162 = vmatpush1.msra.mxu0 %v120
    %163 = vmatprep.subr.mxu0 0.0
    %164 = vmatpush1.msra.mxu0 %v121
    %165 = vmatprep.subr.mxu0 0.0
    %166 = vmatpush1.msra.mxu0 %v122
    %167 = vmatprep.subr.mxu0 0.0
    %168 = vmatpush1.msra.mxu0 %v123
    %169 = vmatprep.subr.mxu0 0.0
    %170 = vmatpush1.msra.mxu0 %v124
    %171 = vmatprep.subr.mxu0 0.0
    %172 = vmatpush1.msra.mxu0 %v125
    %173 = vmatprep.subr.mxu0 0.0
    %174 = vmatpush1.msra.mxu0 %v126
    %175 = vmatprep.subr.mxu0 0.0
    %176 = vmatpush1.msra.mxu0 %v127
    %177 = vmatprep.subr.mxu0 0.0
    %178 = vmatpush1.msra.mxu0 %v128
    %179 = vmatprep.subr.mxu0 0.0
    %180 = vmatpush1.msra.mxu0 %v129
    %181 = vmatprep.subr.mxu0 0.0
    %182 = vmatpush1.msra.mxu0 %v130
    %183 = vmatprep.subr.mxu0 0.0
    %184 = vmatpush1.msra.mxu0 %v131
    %185 = vmatprep.subr.mxu0 0.0
    %186 = vmatpush1.msra.mxu0 %v132
    %187 = vmatprep.subr.mxu0 0.0
    %188 = vmatpush1.msra.mxu0 %v133
    %189 = vmatprep.subr.mxu0 0.0
    %190 = vmatpush1.msra.mxu0 %v134
    %191 = vmatprep.subr.mxu0 0.0
    %192 = vmatpush1.msra.mxu0 %v135
    %193 = vmatprep.subr.mxu0 0.0
    %194 = vmatpush1.msra.mxu0 %v136
    %195 = vmatprep.subr.mxu0 0.0
    %196 = vmatpush1.msra.mxu0 %v137
    %197 = vmatprep.subr.mxu0 0.0
    %198 = vmatpush1.msra.mxu0 %v138
    %199 = vmatprep.subr.mxu0 0.0
    %200 = vmatpush1.msra.mxu0 %v139
    %201 = vmatprep.subr.mxu0 0.0
    %202 = vmatpush1.msra.mxu0 %v140
    %203 = vmatprep.subr.mxu0 0.0
    %204 = vmatpush1.msra.mxu0 %v141
    %205 = vmatprep.subr.mxu0 0.0
    %206 = vmatpush1.msra.mxu0 %v142
    %207 = vmatprep.subr.mxu0 0.0
    %208 = vmatpush1.msra.mxu0 %v143
    %209 = vmatprep.subr.mxu0 0.0
    %210 = vmatpush1.msra.mxu0 %v144
    %211 = vmatprep.subr.mxu0 0.0
    %212 = vmatpush1.msra.mxu0 %v145
    %213 = vmatprep.subr.mxu0 0.0
    %214 = vmatpush1.msra.mxu0 %v146
    %215 = vmatprep.subr.mxu0 0.0
    %216 = vmatpush1.msra.mxu0 %v147
    %217 = vmatprep.subr.mxu0 0.0
    %218 = vmatpush1.msra.mxu0 %v148
    %219 = vmatprep.subr.mxu0 0.0
    %220 = vmatpush1.msra.mxu0 %v149
    %221 = vmatprep.mubr.f32.mxu0 %v117
    %222 = vmatmul.mubr.f32.gmra.mrb[0].mxu0 %v116
    %v223 = vpop.f32.mrb[0].mxu0
    %v224 = vadd.f32 %v155, %v223
    %v225 = vpop.f32.mrb[0].mxu0
    %226 = vdwg.mxu0
    %v227 = vld [vmem:[#allocation10] sm:$0xff]
    %v228 = vld [vmem:[#allocation10 + $0x8] sm:$0xff]
    %v229 = vld [vmem:[#allocation10 + $0x10] sm:$0x3]
    %vm230 = vcmask 146432
    %v232 = vsel %vm230, %v224, 0
    %vm234 = vcmask 1041408
    %v236 = vsel %vm234, %v229, 0
    %238 = vmatprep.subr.mxu0 0.0
    %239 = vmatpush1.msra.mxu0 %v227
    %240 = vmatprep.subr.mxu0 0.0
    %241 = vmatpush1.msra.mxu0 %v228
    %242 = vmatprep.subr.mxu0 0.0
    %243 = vmatpush1.msra.mxu0 %v236
    %244 = vmatprep.subr.mxu0 0.0
    %245 = vmatpush1.msra.mxu0 0.0
    %246 = vmatprep.subr.mxu0 0.0
    %247 = vmatpush1.msra.mxu0 0.0
    %248 = vmatprep.subr.mxu0 0.0
    %249 = vmatpush1.msra.mxu0 0.0
    %250 = vmatprep.subr.mxu0 0.0
    %251 = vmatpush1.msra.mxu0 0.0
    %252 = vmatprep.subr.mxu0 0.0
    %253 = vmatpush1.msra.mxu0 0.0
    %254 = vmatprep.subr.mxu0 0.0
    %255 = vmatpush1.msra.mxu0 0.0
    %256 = vmatprep.subr.mxu0 0.0
    %257 = vmatpush1.msra.mxu0 0.0
    %258 = vmatprep.subr.mxu0 0.0
    %259 = vmatpush1.msra.mxu0 0.0
    %260 = vmatprep.subr.mxu0 0.0
    %261 = vmatpush1.msra.mxu0 0.0
    %262 = vmatprep.subr.mxu0 0.0
    %263 = vmatpush1.msra.mxu0 0.0
    %264 = vmatprep.subr.mxu0 0.0
    %265 = vmatpush1.msra.mxu0 0.0
    %266 = vmatprep.subr.mxu0 0.0
    %267 = vmatpush1.msra.mxu0 0.0
    %268 = vmatprep.subr.mxu0 0.0
    %269 = vmatpush1.msra.mxu0 0.0
    %270 = vmatprep.subr.mxu0 0.0
    %271 = vmatpush1.msra.mxu0 0.0
    %272 = vmatprep.subr.mxu0 0.0
    %273 = vmatpush1.msra.mxu0 0.0
    %274 = vmatprep.subr.mxu0 0.0
    %275 = vmatpush1.msra.mxu0 0.0
    %276 = vmatprep.subr.mxu0 0.0
    %277 = vmatpush1.msra.mxu0 0.0
    %278 = vmatprep.subr.mxu0 0.0
    %279 = vmatpush1.msra.mxu0 0.0
    %280 = vmatprep.subr.mxu0 0.0
    %281 = vmatpush1.msra.mxu0 0.0
    %282 = vmatprep.subr.mxu0 0.0
    %283 = vmatpush1.msra.mxu0 0.0
    %284 = vmatprep.subr.mxu0 0.0
    %285 = vmatpush1.msra.mxu0 0.0
    %286 = vmatprep.subr.mxu0 0.0
    %287 = vmatpush1.msra.mxu0 0.0
    %288 = vmatprep.subr.mxu0 0.0
    %289 = vmatpush1.msra.mxu0 0.0
    %290 = vmatprep.subr.mxu0 0.0
    %291 = vmatpush1.msra.mxu0 0.0
    %292 = vmatprep.subr.mxu0 0.0
    %293 = vmatpush1.msra.mxu0 0.0
    %294 = vmatprep.subr.mxu0 0.0
    %295 = vmatpush1.msra.mxu0 0.0
    %296 = vmatprep.subr.mxu0 0.0
    %297 = vmatpush1.msra.mxu0 0.0
    %298 = vmatprep.subr.mxu0 0.0
    %299 = vmatpush1.msra.mxu0 0.0
    %300 = vmatprep.subr.mxu0 0.0
    %301 = vmatpush1.msra.mxu0 0.0
    %302 = vmatprep.mubr.f32.mxu0 0.0
    %303 = vmatmul.mubr.f32.gmra.mrb[0].mxu0 %v232
    %v304 = vpop.f32.mrb[0].mxu0
    %v305 = vadd.f32 0.0, %v304
    %v306 = vpop.f32.mrb[0].mxu0
    %307 = vdwg.mxu0
    %v308 = vld [vmem:[#allocation2] sm:$0xff]
    %310 = vrot.lane.b32.xlu0 %v308, 32
    %v311 = vpop.permute.xlu0 %310
    %vm313 = vcmask 261120
    %v314 = vsel %vm313, %v308, %v311
    %v315 = vmul.f32 %v314, %v305
    %v316 = vld [vmem:[#allocation11] sm:$0xff]
    %v317 = vld [vmem:[#allocation11 + $0x8] sm:$0xff]
    %v318 = vld [vmem:[#allocation11 + $0x10] sm:$0xff]
    %v319 = vld [vmem:[#allocation11 + $0x18] sm:$0xff]
    %v320 = vld [vmem:[#allocation11 + $0x20] sm:$0xff]
    %v321 = vld [vmem:[#allocation11 + $0x28] sm:$0xff]
    %v322 = vld [vmem:[#allocation11 + $0x30] sm:$0xff]
    %v323 = vld [vmem:[#allocation11 + $0x38] sm:$0xff]
    %v324 = vld [vmem:[#allocation13] sm:$0xff]
    %v325 = vld [vmem:[#allocation13 + $0x8] sm:$0xff]
    %v326 = vld [vmem:[#allocation13 + $0x10] sm:$0x3]
    %v328 = vsel %vm234, %v326, 0
    %330 = vmatprep.subr.mxu0 0.0
    %331 = vmatpush1.msra.mxu0 %v324
    %332 = vmatprep.subr.mxu0 0.0
    %333 = vmatpush1.msra.mxu0 %v325
    %334 = vmatprep.subr.mxu0 0.0
    %335 = vmatpush1.msra.mxu0 %v328
    %336 = vmatprep.subr.mxu0 0.0
    %337 = vmatpush1.msra.mxu0 0.0
    %338 = vmatprep.subr.mxu0 0.0
    %339 = vmatpush1.msra.mxu0 0.0
    %340 = vmatprep.subr.mxu0 0.0
    %341 = vmatpush1.msra.mxu0 0.0
    %342 = vmatprep.subr.mxu0 0.0
    %343 = vmatpush1.msra.mxu0 0.0
    %344 = vmatprep.subr.mxu0 0.0
    %345 = vmatpush1.msra.mxu0 0.0
    %346 = vmatprep.subr.mxu0 0.0
    %347 = vmatpush1.msra.mxu0 0.0
    %348 = vmatprep.subr.mxu0 0.0
    %349 = vmatpush1.msra.mxu0 0.0
    %350 = vmatprep.subr.mxu0 0.0
    %351 = vmatpush1.msra.mxu0 0.0
    %352 = vmatprep.subr.mxu0 0.0
    %353 = vmatpush1.msra.mxu0 0.0
    %354 = vmatprep.subr.mxu0 0.0
    %355 = vmatpush1.msra.mxu0 0.0
    %356 = vmatprep.subr.mxu0 0.0
    %357 = vmatpush1.msra.mxu0 0.0
    %358 = vmatprep.subr.mxu0 0.0
    %359 = vmatpush1.msra.mxu0 0.0
    %360 = vmatprep.subr.mxu0 0.0
    %361 = vmatpush1.msra.mxu0 0.0
    %362 = vmatprep.subr.mxu0 0.0
    %363 = vmatpush1.msra.mxu0 0.0
    %364 = vmatprep.subr.mxu0 0.0
    %365 = vmatpush1.msra.mxu0 0.0
    %366 = vmatprep.subr.mxu0 0.0
    %367 = vmatpush1.msra.mxu0 0.0
    %368 = vmatprep.subr.mxu0 0.0
    %369 = vmatpush1.msra.mxu0 0.0
    %370 = vmatprep.subr.mxu0 0.0
    %371 = vmatpush1.msra.mxu0 0.0
    %372 = vmatprep.subr.mxu0 0.0
    %373 = vmatpush1.msra.mxu0 0.0
    %374 = vmatprep.subr.mxu0 0.0
    %375 = vmatpush1.msra.mxu0 0.0
    %376 = vmatprep.subr.mxu0 0.0
    %377 = vmatpush1.msra.mxu0 0.0
    %378 = vmatprep.subr.mxu0 0.0
    %379 = vmatpush1.msra.mxu0 0.0
    %380 = vmatprep.subr.mxu0 0.0
    %381 = vmatpush1.msra.mxu0 0.0
    %382 = vmatprep.subr.mxu0 0.0
    %383 = vmatpush1.msra.mxu0 0.0
    %384 = vmatprep.subr.mxu0 0.0
    %385 = vmatpush1.msra.mxu0 0.0
    %386 = vmatprep.subr.mxu0 0.0
    %387 = vmatpush1.msra.mxu0 0.0
    %388 = vmatprep.subr.mxu0 0.0
    %389 = vmatpush1.msra.mxu0 0.0
    %390 = vmatprep.subr.mxu0 0.0
    %391 = vmatpush1.msra.mxu0 0.0
    %392 = vmatprep.subr.mxu0 0.0
    %393 = vmatpush1.msra.mxu0 0.0
    %394 = vmatprep.mubr.f32.mxu0 0.0
    %395 = vmatmul.mubr.f32.gmra.mrb[0].mxu0 %v232
    %v396 = vpop.f32.mrb[0].mxu0
    %v397 = vadd.f32 0.0, %v396
    %v398 = vpop.f32.mrb[0].mxu0
    %399 = vdwg.mxu0
    %vm400 = vcmask 523264
    %v402 = vsel %vm400, %v315, 0
    %404 = vmatprep.subr.mxu0 0.0
    %405 = vmatpush1.msra.mxu0 %v316
    %406 = vmatprep.subr.mxu0 0.0
    %407 = vmatpush1.msra.mxu0 %v317
    %408 = vmatprep.subr.mxu0 0.0
    %409 = vmatpush1.msra.mxu0 %v318
    %410 = vmatprep.subr.mxu0 0.0
    %411 = vmatpush1.msra.mxu0 %v319
    %412 = vmatprep.subr.mxu0 0.0
    %413 = vmatpush1.msra.mxu0 %v320
    %414 = vmatprep.subr.mxu0 0.0
    %415 = vmatpush1.msra.mxu0 %v321
    %416 = vmatprep.subr.mxu0 0.0
    %417 = vmatpush1.msra.mxu0 %v322
    %418 = vmatprep.subr.mxu0 0.0
    %419 = vmatpush1.msra.mxu0 %v323
    %420 = vmatprep.subr.mxu0 0.0
    %421 = vmatpush1.msra.mxu0 0.0
    %422 = vmatprep.subr.mxu0 0.0
    %423 = vmatpush1.msra.mxu0 0.0
    %424 = vmatprep.subr.mxu0 0.0
    %425 = vmatpush1.msra.mxu0 0.0
    %426 = vmatprep.subr.mxu0 0.0
    %427 = vmatpush1.msra.mxu0 0.0
    %428 = vmatprep.subr.mxu0 0.0
    %429 = vmatpush1.msra.mxu0 0.0
    %430 = vmatprep.subr.mxu0 0.0
    %431 = vmatpush1.msra.mxu0 0.0
    %432 = vmatprep.subr.mxu0 0.0
    %433 = vmatpush1.msra.mxu0 0.0
    %434 = vmatprep.subr.mxu0 0.0
    %435 = vmatpush1.msra.mxu0 0.0
    %436 = vmatprep.subr.mxu0 0.0
    %437 = vmatpush1.msra.mxu0 0.0
    %438 = vmatprep.subr.mxu0 0.0
    %439 = vmatpush1.msra.mxu0 0.0
    %440 = vmatprep.subr.mxu0 0.0
    %441 = vmatpush1.msra.mxu0 0.0
    %442 = vmatprep.subr.mxu0 0.0
    %443 = vmatpush1.msra.mxu0 0.0
    %444 = vmatprep.subr.mxu0 0.0
    %445 = vmatpush1.msra.mxu0 0.0
    %446 = vmatprep.subr.mxu0 0.0
    %447 = vmatpush1.msra.mxu0 0.0
    %448 = vmatprep.subr.mxu0 0.0
    %449 = vmatpush1.msra.mxu0 0.0
    %450 = vmatprep.subr.mxu0 0.0
    %451 = vmatpush1.msra.mxu0 0.0
    %452 = vmatprep.subr.mxu0 0.0
    %453 = vmatpush1.msra.mxu0 0.0
    %454 = vmatprep.subr.mxu0 0.0
    %455 = vmatpush1.msra.mxu0 0.0
    %456 = vmatprep.subr.mxu0 0.0
    %457 = vmatpush1.msra.mxu0 0.0
    %458 = vmatprep.subr.mxu0 0.0
    %459 = vmatpush1.msra.mxu0 0.0
    %460 = vmatprep.subr.mxu0 0.0
    %461 = vmatpush1.msra.mxu0 0.0
    %462 = vmatprep.subr.mxu0 0.0
    %463 = vmatpush1.msra.mxu0 0.0
    %464 = vmatprep.subr.mxu0 0.0
    %465 = vmatpush1.msra.mxu0 0.0
    %466 = vmatprep.subr.mxu0 0.0
    %467 = vmatpush1.msra.mxu0 0.0
    %468 = vmatprep.mubr.f32.mxu0 0.0
    %469 = vmatmul.mubr.f32.gmra.mrb[0].mxu0 %v402
    %v470 = vpop.f32.mrb[0].mxu0
    %v471 = vadd.f32 %v397, %v470
    %v472 = vpop.f32.mrb[0].mxu0
    %473 = vdwg.mxu0
    %vm474 = vcmask 64512
    %475 = vst.msk [vmem:[#allocation14] sm:$0xff] %vm474, %v471
    // Predicated region
    $region58: #{tpu_custom_call.1} parent=1 // pred_check
      _
    $region59: #{tpu_custom_call.1} parent=1 // pred_check_branch
      %477 = sbr.rel (0) target = $region61
    $region60: #{tpu_custom_call.1} parent=1 // pred_region
      %s479 = ssub.s32 128, 128
      %480 = vsyncadd [#allocation4], %s479
      %s482 = sshll.u32 [#allocation14], 4
      %s483 = int_to_ptr.vmem [resolvable:$true] %s482
      %485 = dma.vmem_to_hbm [thread:$0]  %s483, 128, %s7, [#allocation4]
    $region61: #{tpu_custom_call.1} parent=1 // pred_fallthru
      _
    // Predicated region
    $region62: #{tpu_custom_call.1} parent=1 // pred_check
      _
    $region63: #{tpu_custom_call.1} parent=1 // pred_check_branch
      %487 = sbr.rel (0) target = $region65
    $region64: #{tpu_custom_call.1} parent=1 // pred_region
      %488 = dma.done [#allocation4], 128
    $region65: #{tpu_custom_call.1} parent=1 // pred_fallthru
      _
    %489 = vsyncpa [#allocation3], 1
    %490 = vsyncpa [#allocation6], 1
    %491 = vsyncpa [#allocation9], 1
    %492 = vsyncpa [#allocation12], 1
    %493 = vsyncpa [#allocation4], 1

</llo_original>
